<compile_context>
chip_gen: v5e
topology: v5e:2x2
jax: 0.10.0
libtpu: 0.0.40
codegen_flags: <defaults>
</compile_context>

<pallas_src>
import functools
import math

import jax
import jax.numpy as jnp
from jax.experimental import pallas as pl
from jax.experimental.pallas import tpu as pltpu

_LANE = 128


def _round_up(v, m):
    return ((v + m - 1) // m) * m


def _fused_gnn_kernel(*refs, num_layers: int, matmul_dtype):
    """Fused multi-layer DirectionalGNN forward.  All refs live in VMEM.

    Input refs (in order):
      x                      [NP, CP] f32
      (gsrc, sdst, ang)      only when num_layers > 1:
         gsrc [EP, NP] one-hot(src)    matmul_dtype
         sdst [NP, EP] one-hot(dst).T  matmul_dtype
         ang  [EP, 2]  (sin, cos)      f32
      adj  [NP, NP] = sdst @ gsrc      matmul_dtype
      s    [NP, 2]  = sdst @ ang       f32
      deg  [NP, 1]  in-degree          f32
      per layer: wx [CP, CP] matmul_dtype, wa [8, CP] f32,
                 blin [1, CP] f32,     bias [1, CP] f32
    """
    *in_refs, out_ref = refs
    idx = 0
    x_ref = in_refs[idx]
    idx += 1
    if num_layers > 1:
        gsrc_ref, sdst_ref, ang_ref = in_refs[idx:idx + 3]
        idx += 3
    adj_ref, s_ref, deg_ref = in_refs[idx:idx + 3]
    idx += 3
    layer_refs = in_refs[idx:]

    h = x_ref[...]                                            # [NP, CP] f32

    if num_layers > 1:
        ang = ang_ref[...]                                    # [EP, 2] f32
        sin_e = ang[:, 0:1]
        cos_e = ang[:, 1:2]
        for li in range(num_layers - 1):                      # hidden layers
            wx, wa, blin, bias = layer_refs[4 * li: 4 * li + 4]
            # gather x_j = x[src] as a one-hot matmul on the MXU.  gsrc is fed
            # in its stored (bf16) dtype -- no in-kernel f32 upcast copy --
            # and the result is a pure selection, so it is exact even when
            # accumulated in matmul_dtype.
            x_j = jnp.dot(gsrc_ref[...], h.astype(matmul_dtype),
                          preferred_element_type=matmul_dtype)      # [EP, CP]
            # linear, feature part on the MXU (f32 accumulation) ...
            msg = jnp.dot(x_j, wx[...],
                          preferred_element_type=jnp.float32)       # [EP, CP]
            # ... angle part on the VPU (avoid a degenerate K=2 MXU pass)
            msg = msg + sin_e * wa[0:1, :] + cos_e * wa[1:2, :] + blin[...]
            msg = jnp.tanh(msg)
            # scatter-add over dst as a one-hot matmul (f32 accumulation).
            agg = jnp.dot(sdst_ref[...], msg.astype(matmul_dtype),
                          preferred_element_type=jnp.float32)       # [NP, CP]
            h = jnp.maximum(agg + bias[...], 0.0)             # +bias, ReLU

    # Final layer (no tanh / no ReLU), collapsed to node-sized operands only:
    #   out = A @ (h @ Wx) + s @ Wa + deg * b_lin + bias
    wx, wa, blin, bias = layer_refs[4 * (num_layers - 1): 4 * num_layers]
    hw = jnp.dot(h.astype(matmul_dtype), wx[...],
                 preferred_element_type=jnp.float32)                # [NP, CP]
    out = jnp.dot(adj_ref[...], hw.astype(matmul_dtype),
                  preferred_element_type=jnp.float32)               # [NP, CP]
    s = s_ref[...]
    out = out + s[:, 0:1] * wa[0:1, :] + s[:, 1:2] * wa[1:2, :]
    out = out + deg_ref[...] * blin[...] + bias[...]
    out_ref[...] = out


def precompute_graph(edge_index, edge_attr, num_nodes, onehot_dtype=jnp.bfloat16):
    """Build padded, graph-constant operands ONCE for a static graph.

    Run eagerly (outside jit) and reuse the returned dict across forward
    calls, so the N x E x N adjacency build and the O(E*N) one-hot
    materializations are not repeated on every jitted forward call.
    """
    e = edge_index.shape[1]
    NP = _round_up(num_nodes, _LANE)
    EP = _round_up(e, _LANE)
    src, dst = edge_index[0], edge_index[1]

    gsrc = jnp.pad(jax.nn.one_hot(src, NP, dtype=jnp.float32),
                   ((0, EP - e), (0, 0)))                             # [EP, NP]
    sdst = jnp.pad(jax.nn.one_hot(dst, NP, dtype=jnp.float32),
                   ((0, EP - e), (0, 0))).T                           # [NP, EP]
    adj = sdst @ gsrc                                                 # [NP, NP]
    # NOTE: on a VMEM-constrained v7x run, adj could be dropped and the final
    # layer computed like a hidden layer reusing gsrc/sdst; kept here since
    # v5e/v6e VMEM is plentiful at these sizes.
    if onehot_dtype == jnp.bfloat16:
        # bf16 is exact for integers <= 256; 0/1 for the grid graph, but guard
        # against general multigraphs with large edge multiplicities.
        assert float(jnp.max(adj)) <= 256.0, "adj multiplicity too large for bf16"

    rad = edge_attr * (math.pi / 180.0)
    ang = (jnp.zeros((EP, 2), jnp.float32)
           .at[:e, 0].set(jnp.sin(rad))
           .at[:e, 1].set(jnp.cos(rad)))                              # [EP, 2]
    s_nodes = sdst @ ang                                              # [NP, 2]
    deg = jnp.sum(sdst, axis=1, keepdims=True)                        # [NP, 1]

    return dict(gsrc=gsrc.astype(onehot_dtype),
                sdst=sdst.astype(onehot_dtype),
                adj=adj.astype(onehot_dtype),
                ang=ang, s_nodes=s_nodes, deg=deg)


def grid_gnn_forward(x, graph, params, *, matmul_dtype=jnp.bfloat16):
    """Pallas-backed forward of GridGNNWithAngles (use_angle=True).

    `graph` must come from precompute_graph(..., onehot_dtype=matmul_dtype)
    and is reused across calls for a static edge_index / edge_attr.
    """
    n, in_c = x.shape
    num_layers = len(params)
    out_c = params[-1]["W"].shape[0]

    NP = graph["adj"].shape[0]
    CP = _round_up(max([in_c] + [p["W"].shape[0] for p in params]), _LANE)
    assert graph["adj"].dtype == matmul_dtype, "graph dtype must match matmul_dtype"

    x_p = jnp.zeros((NP, CP), jnp.float32).at[:n, :in_c].set(x)

    # zero-padded, lane-dense per-layer parameters
    layer_args = []
    cin = in_c
    for p in params:
        cout = p["W"].shape[0]
        wx = jnp.zeros((CP, CP), matmul_dtype).at[:cin, :cout].set(
            p["W"][:, :cin].T.astype(matmul_dtype))
        wa = jnp.zeros((8, CP), jnp.float32).at[:2, :cout].set(
            p["W"][:, cin:cin + 2].T)
        blin = jnp.zeros((1, CP), jnp.float32).at[0, :cout].set(p["b_lin"])
        bias = jnp.zeros((1, CP), jnp.float32).at[0, :cout].set(p["bias"])
        layer_args += [wx, wa, blin, bias]
        cin = cout

    inputs = [x_p]
    if num_layers > 1:   # single-layer models never touch gsrc/sdst/ang
        inputs += [graph["gsrc"], graph["sdst"], graph["ang"]]
    inputs += [graph["adj"], graph["s_nodes"], graph["deg"]]
    inputs += layer_args

    out_bytes = NP * CP * 4
    total_bytes = sum(a.size * a.dtype.itemsize for a in inputs) + out_bytes
    vmem_limit = min(max(int(total_bytes * 1.5) + (8 << 20), 32 << 20), 112 << 20)

    kernel = functools.partial(_fused_gnn_kernel, num_layers=num_layers,
                               matmul_dtype=matmul_dtype)
    vmem = pl.BlockSpec(memory_space=pltpu.MemorySpace.VMEM)
    out = pl.pallas_call(
        kernel,
        out_shape=jax.ShapeDtypeStruct((NP, CP), jnp.float32),
        in_specs=[vmem] * len(inputs),
        out_specs=vmem,
        compiler_params=pltpu.CompilerParams(vmem_limit_bytes=vmem_limit),
    )(*inputs)
    return out[:n, :out_c]


def ref_forward(x, edge_index, edge_attr, params):
    """Pure-JAX reference matching the PyTorch module semantics."""
    src, dst = edge_index[0], edge_index[1]
    n = x.shape[0]
    rad = edge_attr * (math.pi / 180.0)
    ang = jnp.stack([jnp.sin(rad), jnp.cos(rad)], axis=1)
    h = x
    nl = len(params)
    for li, p in enumerate(params):
        x_j = h[src]
        comb = jnp.concatenate([x_j, ang], axis=1)
        msg = comb @ p["W"].T + p["b_lin"]
        if li < nl - 1:
            msg = jnp.tanh(msg)
        agg = jnp.zeros((n, p["W"].shape[0]), jnp.float32).at[dst].add(msg)
        out = agg + p["bias"]
        if li < nl - 1:
            out = jnp.maximum(out, 0.0)
        h = out
    return h


if __name__ == "__main__":
    IN_C, HID_C, OUT_C = 4, 32, 8
    NUM_LAYERS = 2
    GRID = 4
    N = GRID * GRID

    # 4x4 grid graph with 4-neighborhood edges and directional angles (degrees).
    src_l, dst_l, ang_l = [], [], []
    for r in range(GRID):
        for c in range(GRID):
            node = r * GRID + c
            for dr, dc, a in [(0, 1, 0.0), (-1, 0, 90.0), (0, -1, 180.0), (1, 0, 270.0)]:
                rr, cc = r + dr, c + dc
                if 0 <= rr < GRID and 0 <= cc < GRID:
                    src_l.append(node)
                    dst_l.append(rr * GRID + cc)
                    ang_l.append(a)
    edge_index = jnp.array([src_l, dst_l], dtype=jnp.int32)   # [2, E] (E = 48)
    edge_attr = jnp.array(ang_l, dtype=jnp.float32)           # [E]

    key = jax.random.PRNGKey(0)
    kx, *wkeys = jax.random.split(key, 1 + 2 * NUM_LAYERS)
    x = jax.random.normal(kx, (N, IN_C), dtype=jnp.float32)

    # Deterministic parameter init (shapes match the PyTorch module).
    layer_dims = [(IN_C, HID_C), (HID_C, OUT_C)]
    params = []
    for li, (cin, cout) in enumerate(layer_dims):
        kw, kb = wkeys[2 * li], wkeys[2 * li + 1]
        W = jax.random.normal(kw, (cout, cin + 2), dtype=jnp.float32) / math.sqrt(cin + 2)
        b_lin = 0.1 * jax.random.normal(kb, (cout,), dtype=jnp.float32)
        bias = jnp.zeros((cout,), jnp.float32)   # nn.Parameter(torch.zeros(out_channels))
        params.append(dict(W=W, b_lin=b_lin, bias=bias))

    ref = ref_forward(x, edge_index, edge_attr, params)

    # --- exact f32 path: validates kernel structure / graph algebra tightly ---
    graph_f32 = precompute_graph(edge_index, edge_attr, N, onehot_dtype=jnp.float32)
    fwd_f32 = jax.jit(functools.partial(grid_gnn_forward, matmul_dtype=jnp.float32))
    out_f32 = jax.block_until_ready(fwd_f32(x, graph_f32, params))
    assert out_f32.shape == (N, OUT_C)
    assert jnp.allclose(out_f32, ref, atol=1e-4, rtol=1e-4), \
        "f32 Pallas kernel mismatch vs reference"

    # --- fast bf16-MXU path (v6e/v7x production config) ---
    # One-hot operands are exact in bf16; the only added error is bf16
    # rounding of h/msg/hw and the weights (~4e-3 rel per review), hence the
    # looser tolerance here.
    graph_bf16 = precompute_graph(edge_index, edge_attr, N, onehot_dtype=jnp.bfloat16)
    fwd_bf16 = jax.jit(functools.partial(grid_gnn_forward, matmul_dtype=jnp.bfloat16))
    out_bf16 = jax.block_until_ready(fwd_bf16(x, graph_bf16, params))
    assert out_bf16.shape == (N, OUT_C)
    assert jnp.allclose(out_bf16, ref, atol=0.12, rtol=0.05), \
        "bf16 Pallas kernel mismatch vs reference"

    print("KERNEL_OK")
</pallas_src>

<mosaic_0001>
module attributes {stable_mosaic.version = 11 : i64} {
  func.func @_fused_gnn_kernel(%arg0: memref<128x128xf32, #tpu.memory_space<vmem>>, %arg1: memref<128x128xf32, #tpu.memory_space<vmem>>, %arg2: memref<128x128xf32, #tpu.memory_space<vmem>>, %arg3: memref<128x2xf32, #tpu.memory_space<vmem>>, %arg4: memref<128x128xf32, #tpu.memory_space<vmem>>, %arg5: memref<128x2xf32, #tpu.memory_space<vmem>>, %arg6: memref<128x1xf32, #tpu.memory_space<vmem>>, %arg7: memref<128x128xf32, #tpu.memory_space<vmem>>, %arg8: memref<8x128xf32, #tpu.memory_space<vmem>>, %arg9: memref<1x128xf32, #tpu.memory_space<vmem>>, %arg10: memref<1x128xf32, #tpu.memory_space<vmem>>, %arg11: memref<128x128xf32, #tpu.memory_space<vmem>>, %arg12: memref<8x128xf32, #tpu.memory_space<vmem>>, %arg13: memref<1x128xf32, #tpu.memory_space<vmem>>, %arg14: memref<1x128xf32, #tpu.memory_space<vmem>>, %arg15: memref<128x128xf32, #tpu.memory_space<vmem>>) attributes {dimension_semantics = [], scalar_prefetch = 0 : i64, scratch_operands = 0 : i64, tpu.core_type = #tpu.core_type<tc>} {
    %c0 = arith.constant 0 : index
    %c0_0 = arith.constant 0 : index
    %0 = vector.load %arg0[%c0, %c0_0] : memref<128x128xf32, #tpu.memory_space<vmem>>, vector<128x128xf32>
    %c0_1 = arith.constant 0 : index
    %c0_2 = arith.constant 0 : index
    %1 = vector.load %arg3[%c0_1, %c0_2] : memref<128x2xf32, #tpu.memory_space<vmem>>, vector<128x2xf32>
    %2 = vector.extract_strided_slice %1 {offsets = [0, 0], sizes = [128, 1], strides = [1, 1]} : vector<128x2xf32> to vector<128x1xf32>
    %3 = vector.extract_strided_slice %1 {offsets = [0, 1], sizes = [128, 1], strides = [1, 1]} : vector<128x2xf32> to vector<128x1xf32>
    %c0_3 = arith.constant 0 : index
    %c0_4 = arith.constant 0 : index
    %4 = vector.load %arg1[%c0_3, %c0_4] : memref<128x128xf32, #tpu.memory_space<vmem>>, vector<128x128xf32>
    %cst = arith.constant dense<0.000000e+00> : vector<128x128xf32>
    %5 = tpu.matmul %4, %0, %cst {dimension_numbers = #tpu.dot_dimension_numbers<[1], [0], [0], [1], [0, 0, 1, 1], [], []>} : vector<128x128xf32>, vector<128x128xf32>, vector<128x128xf32> -> vector<128x128xf32>
    %c0_5 = arith.constant 0 : index
    %c0_6 = arith.constant 0 : index
    %6 = vector.load %arg7[%c0_5, %c0_6] : memref<128x128xf32, #tpu.memory_space<vmem>>, vector<128x128xf32>
    %cst_7 = arith.constant dense<0.000000e+00> : vector<128x128xf32>
    %7 = tpu.matmul %5, %6, %cst_7 {dimension_numbers = #tpu.dot_dimension_numbers<[1], [0], [0], [1], [0, 0, 1, 1], [], []>} : vector<128x128xf32>, vector<128x128xf32>, vector<128x128xf32> -> vector<128x128xf32>
    %c0_8 = arith.constant 0 : index
    %c0_9 = arith.constant 0 : index
    %8 = vector.load %arg8[%c0_8, %c0_9] : memref<8x128xf32, #tpu.memory_space<vmem>>, vector<1x128xf32>
    %9 = vector.broadcast %2 : vector<128x1xf32> to vector<128x128xf32>
    %10 = vector.broadcast %8 : vector<1x128xf32> to vector<128x128xf32>
    %11 = arith.mulf %9, %10 : vector<128x128xf32>
    %12 = arith.addf %7, %11 : vector<128x128xf32>
    %c1 = arith.constant 1 : index
    %c0_10 = arith.constant 0 : index
    %13 = vector.load %arg8[%c1, %c0_10] : memref<8x128xf32, #tpu.memory_space<vmem>>, vector<1x128xf32>
    %14 = vector.broadcast %3 : vector<128x1xf32> to vector<128x128xf32>
    %15 = vector.broadcast %13 : vector<1x128xf32> to vector<128x128xf32>
    %16 = arith.mulf %14, %15 : vector<128x128xf32>
    %17 = arith.addf %12, %16 : vector<128x128xf32>
    %c0_11 = arith.constant 0 : index
    %c0_12 = arith.constant 0 : index
    %18 = vector.load %arg9[%c0_11, %c0_12] : memref<1x128xf32, #tpu.memory_space<vmem>>, vector<1x128xf32>
    %19 = vector.broadcast %18 : vector<1x128xf32> to vector<128x128xf32>
    %20 = arith.addf %17, %19 : vector<128x128xf32>
    %21 = math.tanh %20 : vector<128x128xf32>
    %c0_13 = arith.constant 0 : index
    %c0_14 = arith.constant 0 : index
    %22 = vector.load %arg2[%c0_13, %c0_14] : memref<128x128xf32, #tpu.memory_space<vmem>>, vector<128x128xf32>
    %cst_15 = arith.constant dense<0.000000e+00> : vector<128x128xf32>
    %23 = tpu.matmul %22, %21, %cst_15 {dimension_numbers = #tpu.dot_dimension_numbers<[1], [0], [0], [1], [0, 0, 1, 1], [], []>} : vector<128x128xf32>, vector<128x128xf32>, vector<128x128xf32> -> vector<128x128xf32>
    %c0_16 = arith.constant 0 : index
    %c0_17 = arith.constant 0 : index
    %24 = vector.load %arg10[%c0_16, %c0_17] : memref<1x128xf32, #tpu.memory_space<vmem>>, vector<1x128xf32>
    %25 = vector.broadcast %24 : vector<1x128xf32> to vector<128x128xf32>
    %26 = arith.addf %23, %25 : vector<128x128xf32>
    %cst_18 = arith.constant 0.000000e+00 : f32
    %27 = vector.broadcast %cst_18 : f32 to vector<128x128xf32>
    %28 = arith.maximumf %26, %27 : vector<128x128xf32>
    %c0_19 = arith.constant 0 : index
    %c0_20 = arith.constant 0 : index
    %29 = vector.load %arg11[%c0_19, %c0_20] : memref<128x128xf32, #tpu.memory_space<vmem>>, vector<128x128xf32>
    %cst_21 = arith.constant dense<0.000000e+00> : vector<128x128xf32>
    %30 = tpu.matmul %28, %29, %cst_21 {dimension_numbers = #tpu.dot_dimension_numbers<[1], [0], [0], [1], [0, 0, 1, 1], [], []>} : vector<128x128xf32>, vector<128x128xf32>, vector<128x128xf32> -> vector<128x128xf32>
    %c0_22 = arith.constant 0 : index
    %c0_23 = arith.constant 0 : index
    %31 = vector.load %arg4[%c0_22, %c0_23] : memref<128x128xf32, #tpu.memory_space<vmem>>, vector<128x128xf32>
    %cst_24 = arith.constant dense<0.000000e+00> : vector<128x128xf32>
    %32 = tpu.matmul %31, %30, %cst_24 {dimension_numbers = #tpu.dot_dimension_numbers<[1], [0], [0], [1], [0, 0, 1, 1], [], []>} : vector<128x128xf32>, vector<128x128xf32>, vector<128x128xf32> -> vector<128x128xf32>
    %c0_25 = arith.constant 0 : index
    %c0_26 = arith.constant 0 : index
    %33 = vector.load %arg5[%c0_25, %c0_26] : memref<128x2xf32, #tpu.memory_space<vmem>>, vector<128x2xf32>
    %34 = vector.extract_strided_slice %33 {offsets = [0, 0], sizes = [128, 1], strides = [1, 1]} : vector<128x2xf32> to vector<128x1xf32>
    %c0_27 = arith.constant 0 : index
    %c0_28 = arith.constant 0 : index
    %35 = vector.load %arg12[%c0_27, %c0_28] : memref<8x128xf32, #tpu.memory_space<vmem>>, vector<1x128xf32>
    %36 = vector.broadcast %34 : vector<128x1xf32> to vector<128x128xf32>
    %37 = vector.broadcast %35 : vector<1x128xf32> to vector<128x128xf32>
    %38 = arith.mulf %36, %37 : vector<128x128xf32>
    %39 = arith.addf %32, %38 : vector<128x128xf32>
    %40 = vector.extract_strided_slice %33 {offsets = [0, 1], sizes = [128, 1], strides = [1, 1]} : vector<128x2xf32> to vector<128x1xf32>
    %c1_29 = arith.constant 1 : index
    %c0_30 = arith.constant 0 : index
    %41 = vector.load %arg12[%c1_29, %c0_30] : memref<8x128xf32, #tpu.memory_space<vmem>>, vector<1x128xf32>
    %42 = vector.broadcast %40 : vector<128x1xf32> to vector<128x128xf32>
    %43 = vector.broadcast %41 : vector<1x128xf32> to vector<128x128xf32>
    %44 = arith.mulf %42, %43 : vector<128x128xf32>
    %45 = arith.addf %39, %44 : vector<128x128xf32>
    %c0_31 = arith.constant 0 : index
    %c0_32 = arith.constant 0 : index
    %46 = vector.load %arg6[%c0_31, %c0_32] : memref<128x1xf32, #tpu.memory_space<vmem>>, vector<128x1xf32>
    %c0_33 = arith.constant 0 : index
    %c0_34 = arith.constant 0 : index
    %47 = vector.load %arg13[%c0_33, %c0_34] : memref<1x128xf32, #tpu.memory_space<vmem>>, vector<1x128xf32>
    %48 = vector.broadcast %46 : vector<128x1xf32> to vector<128x128xf32>
    %49 = vector.broadcast %47 : vector<1x128xf32> to vector<128x128xf32>
    %50 = arith.mulf %48, %49 : vector<128x128xf32>
    %51 = arith.addf %45, %50 : vector<128x128xf32>
    %c0_35 = arith.constant 0 : index
    %c0_36 = arith.constant 0 : index
    %52 = vector.load %arg14[%c0_35, %c0_36] : memref<1x128xf32, #tpu.memory_space<vmem>>, vector<1x128xf32>
    %53 = vector.broadcast %52 : vector<1x128xf32> to vector<128x128xf32>
    %54 = arith.addf %51, %53 : vector<128x128xf32>
    %c0_37 = arith.constant 0 : index
    %c0_38 = arith.constant 0 : index
    %55 = vector.load %arg15[%c0_37, %c0_38] : memref<128x128xf32, #tpu.memory_space<vmem>>, vector<128x128xf32>
    tpu.vector_store %arg15[%c0_37, %c0_38], %54 {strides = array<i32>} : memref<128x128xf32, #tpu.memory_space<vmem>>, vector<128x128xf32>,
    return
  }
}

</mosaic_0001>

<llo_original>
// kernel: grid_gnn_forward.1
$region0: #{grid_gnn_forward.1}
  #allocation0 [shape = 'u32[]', space=smem, size = 0x4, offset = 0x4, fixed_abs, tag = 'smem constant byte address 0x4 - core index']
  #allocation1 [shape = 'u32[72,128]{1,0:T(1,128)}', space=vmem, size = 0x9000, scoped, tag = 'internal scratch']
  %s0 = inlined_call_operand.vmem [shape: f32[128,128], index: 0, kind: input, shape index: {}]
  %s1 = inlined_call_operand.vmem [shape: f32[128,128], index: 1, kind: input, shape index: {}]
  %s2 = inlined_call_operand.vmem [shape: f32[128,128], index: 2, kind: input, shape index: {}]
  %s3 = inlined_call_operand.vmem [shape: f32[128,2], index: 3, kind: input, shape index: {}]
  %s4 = inlined_call_operand.vmem [shape: f32[128,128], index: 4, kind: input, shape index: {}]
  %s5 = inlined_call_operand.vmem [shape: f32[128,2], index: 5, kind: input, shape index: {}]
  %s6 = inlined_call_operand.vmem [shape: f32[128,1], index: 6, kind: input, shape index: {}]
  %s7 = inlined_call_operand.vmem [shape: f32[128,128], index: 7, kind: input, shape index: {}]
  %s8 = inlined_call_operand.vmem [shape: f32[8,128], index: 8, kind: input, shape index: {}]
  %s9 = inlined_call_operand.vmem [shape: f32[1,128], index: 9, kind: input, shape index: {}]
  %s10 = inlined_call_operand.vmem [shape: f32[1,128], index: 10, kind: input, shape index: {}]
  %s11 = inlined_call_operand.vmem [shape: f32[128,128], index: 11, kind: input, shape index: {}]
  %s12 = inlined_call_operand.vmem [shape: f32[8,128], index: 12, kind: input, shape index: {}]
  %s13 = inlined_call_operand.vmem [shape: f32[1,128], index: 13, kind: input, shape index: {}]
  %s14 = inlined_call_operand.vmem [shape: f32[1,128], index: 14, kind: input, shape index: {}]
  %s15 = inlined_call_operand.vmem [shape: f32[128,128], index: 15, kind: output, shape index: {}]
  %s16 = sld [smem:[#allocation0]]
  $region70: #{grid_gnn_forward.1} parent=0
    _
  %s18 = ssub.s32 1, %s16
  %s19 = scalar_select 0, %s18, %s16
  // Predicated region
  $region2: #{grid_gnn_forward.1} parent=0 // pred_check
    _
  $region3: #{grid_gnn_forward.1} parent=0 // pred_check_branch
    %21 = sbr.rel (0) target = $region5
  $region4: #{grid_gnn_forward.1} parent=0 // pred_region
    _
  $region5: #{grid_gnn_forward.1} parent=0 // pred_fallthru
    _
  // Predicated region
  $region6: #{grid_gnn_forward.1} parent=0 // pred_check
    _
  $region7: #{grid_gnn_forward.1} parent=0 // pred_check_branch
    %23 = sbr.rel (0) target = $region9
  $region8: #{grid_gnn_forward.1} parent=0 // pred_region
    _
  $region9: #{grid_gnn_forward.1} parent=0 // pred_fallthru
    _
  // Predicated region
  $region10: #{grid_gnn_forward.1} parent=0 // pred_check
    _
  $region11: #{grid_gnn_forward.1} parent=0 // pred_check_branch
    %25 = sbr.rel (0) target = $region13
  $region12: #{grid_gnn_forward.1} parent=0 // pred_region
    _
  $region13: #{grid_gnn_forward.1} parent=0 // pred_fallthru
    _
  // Predicated region
  $region14: #{grid_gnn_forward.1} parent=0 // pred_check
    _
  $region15: #{grid_gnn_forward.1} parent=0 // pred_check_branch
    %27 = sbr.rel (0) target = $region17
  $region16: #{grid_gnn_forward.1} parent=0 // pred_region
    _
  $region17: #{grid_gnn_forward.1} parent=0 // pred_fallthru
    _
  // Predicated region
  $region18: #{grid_gnn_forward.1} parent=0 // pred_check
    _
  $region19: #{grid_gnn_forward.1} parent=0 // pred_check_branch
    %29 = sbr.rel (0) target = $region21
  $region20: #{grid_gnn_forward.1} parent=0 // pred_region
    _
  $region21: #{grid_gnn_forward.1} parent=0 // pred_fallthru
    _
  // Predicated region
  $region22: #{grid_gnn_forward.1} parent=0 // pred_check
    _
  $region23: #{grid_gnn_forward.1} parent=0 // pred_check_branch
    %31 = sbr.rel (0) target = $region25
  $region24: #{grid_gnn_forward.1} parent=0 // pred_region
    _
  $region25: #{grid_gnn_forward.1} parent=0 // pred_fallthru
    _
  // Predicated region
  $region26: #{grid_gnn_forward.1} parent=0 // pred_check
    _
  $region27: #{grid_gnn_forward.1} parent=0 // pred_check_branch
    %33 = sbr.rel (0) target = $region29
  $region28: #{grid_gnn_forward.1} parent=0 // pred_region
    _
  $region29: #{grid_gnn_forward.1} parent=0 // pred_fallthru
    _
  // Predicated region
  $region30: #{grid_gnn_forward.1} parent=0 // pred_check
    _
  $region31: #{grid_gnn_forward.1} parent=0 // pred_check_branch
    %35 = sbr.rel (0) target = $region33
  $region32: #{grid_gnn_forward.1} parent=0 // pred_region
    _
  $region33: #{grid_gnn_forward.1} parent=0 // pred_fallthru
    _
  // Predicated region
  $region34: #{grid_gnn_forward.1} parent=0 // pred_check
    _
  $region35: #{grid_gnn_forward.1} parent=0 // pred_check_branch
    %37 = sbr.rel (0) target = $region37
  $region36: #{grid_gnn_forward.1} parent=0 // pred_region
    _
  $region37: #{grid_gnn_forward.1} parent=0 // pred_fallthru
    _
  // Predicated region
  $region38: #{grid_gnn_forward.1} parent=0 // pred_check
    _
  $region39: #{grid_gnn_forward.1} parent=0 // pred_check_branch
    %39 = sbr.rel (0) target = $region41
  $region40: #{grid_gnn_forward.1} parent=0 // pred_region
    _
  $region41: #{grid_gnn_forward.1} parent=0 // pred_fallthru
    _
  // Predicated region
  $region42: #{grid_gnn_forward.1} parent=0 // pred_check
    _
  $region43: #{grid_gnn_forward.1} parent=0 // pred_check_branch
    %41 = sbr.rel (0) target = $region45
  $region44: #{grid_gnn_forward.1} parent=0 // pred_region
    _
  $region45: #{grid_gnn_forward.1} parent=0 // pred_fallthru
    _
  // Predicated region
  $region46: #{grid_gnn_forward.1} parent=0 // pred_check
    _
  $region47: #{grid_gnn_forward.1} parent=0 // pred_check_branch
    %43 = sbr.rel (0) target = $region49
  $region48: #{grid_gnn_forward.1} parent=0 // pred_region
    _
  $region49: #{grid_gnn_forward.1} parent=0 // pred_fallthru
    _
  // Predicated region
  $region50: #{grid_gnn_forward.1} parent=0 // pred_check
    _
  $region51: #{grid_gnn_forward.1} parent=0 // pred_check_branch
    %45 = sbr.rel (0) target = $region53
  $region52: #{grid_gnn_forward.1} parent=0 // pred_region
    _
  $region53: #{grid_gnn_forward.1} parent=0 // pred_fallthru
    _
  // Predicated region
  $region54: #{grid_gnn_forward.1} parent=0 // pred_check
    _
  $region55: #{grid_gnn_forward.1} parent=0 // pred_check_branch
    %47 = sbr.rel (0) target = $region57
  $region56: #{grid_gnn_forward.1} parent=0 // pred_region
    _
  $region57: #{grid_gnn_forward.1} parent=0 // pred_fallthru
    _
  // Predicated region
  $region58: #{grid_gnn_forward.1} parent=0 // pred_check
    _
  $region59: #{grid_gnn_forward.1} parent=0 // pred_check_branch
    %49 = sbr.rel (0) target = $region61
  $region60: #{grid_gnn_forward.1} parent=0 // pred_region
    _
  $region61: #{grid_gnn_forward.1} parent=0 // pred_fallthru
    _
  %v50 = vld [vmem:[%s0] sm:$0xff]
  %v51 = vld [vmem:[%s0 + $0x8] sm:$0xff]
  %v52 = vld [vmem:[%s0 + $0x10] sm:$0xff]
  %v53 = vld [vmem:[%s0 + $0x18] sm:$0xff]
  %v54 = vld [vmem:[%s0 + $0x20] sm:$0xff]
  %v55 = vld [vmem:[%s0 + $0x28] sm:$0xff]
  %v56 = vld [vmem:[%s0 + $0x30] sm:$0xff]
  %v57 = vld [vmem:[%s0 + $0x38] sm:$0xff]
  %v58 = vld [vmem:[%s0 + $0x40] sm:$0xff]
  %v59 = vld [vmem:[%s0 + $0x48] sm:$0xff]
  %v60 = vld [vmem:[%s0 + $0x50] sm:$0xff]
  %v61 = vld [vmem:[%s0 + $0x58] sm:$0xff]
  %v62 = vld [vmem:[%s0 + $0x60] sm:$0xff]
  %v63 = vld [vmem:[%s0 + $0x68] sm:$0xff]
  %v64 = vld [vmem:[%s0 + $0x70] sm:$0xff]
  %v65 = vld [vmem:[%s0 + $0x78] sm:$0xff]
  %v66 = vld [vmem:[%s3] sm:$0xff]
  %v67 = vld [vmem:[%s3 + $0x8] sm:$0xff]
  %v68 = vld [vmem:[%s3 + $0x10] sm:$0xff]
  %v69 = vld [vmem:[%s3 + $0x18] sm:$0xff]
  %v70 = vld [vmem:[%s3 + $0x20] sm:$0xff]
  %v71 = vld [vmem:[%s3 + $0x28] sm:$0xff]
  %v72 = vld [vmem:[%s3 + $0x30] sm:$0xff]
  %v73 = vld [vmem:[%s3 + $0x38] sm:$0xff]
  %v74 = vld [vmem:[%s3 + $0x40] sm:$0xff]
  %v75 = vld [vmem:[%s3 + $0x48] sm:$0xff]
  %v76 = vld [vmem:[%s3 + $0x50] sm:$0xff]
  %v77 = vld [vmem:[%s3 + $0x58] sm:$0xff]
  %v78 = vld [vmem:[%s3 + $0x60] sm:$0xff]
  %v79 = vld [vmem:[%s3 + $0x68] sm:$0xff]
  %v80 = vld [vmem:[%s3 + $0x70] sm:$0xff]
  %v81 = vld [vmem:[%s3 + $0x78] sm:$0xff]
  %v82 = vld [vmem:[%s1] sm:$0xff]
  %v83 = vld [vmem:[%s1 + $0x8] sm:$0xff]
  %v84 = vld [vmem:[%s1 + $0x10] sm:$0xff]
  %v85 = vld [vmem:[%s1 + $0x18] sm:$0xff]
  %v86 = vld [vmem:[%s1 + $0x20] sm:$0xff]
  %v87 = vld [vmem:[%s1 + $0x28] sm:$0xff]
  %v88 = vld [vmem:[%s1 + $0x30] sm:$0xff]
  %v89 = vld [vmem:[%s1 + $0x38] sm:$0xff]
  %v90 = vld [vmem:[%s1 + $0x40] sm:$0xff]
  %v91 = vld [vmem:[%s1 + $0x48] sm:$0xff]
  %v92 = vld [vmem:[%s1 + $0x50] sm:$0xff]
  %v93 = vld [vmem:[%s1 + $0x58] sm:$0xff]
  %v94 = vld [vmem:[%s1 + $0x60] sm:$0xff]
  %v95 = vld [vmem:[%s1 + $0x68] sm:$0xff]
  %v96 = vld [vmem:[%s1 + $0x70] sm:$0xff]
  %v97 = vld [vmem:[%s1 + $0x78] sm:$0xff]
  %98 = vmatpush.msra.mxu0 %v65
  %99 = vmatpush.msra.mxu0 %v64
  %100 = vmatpush.msra.mxu0 %v63
  %101 = vmatpush.msra.mxu0 %v62
  %102 = vmatpush.msra.mxu0 %v61
  %103 = vmatpush.msra.mxu0 %v60
  %104 = vmatpush.msra.mxu0 %v59
  %105 = vmatpush.msra.mxu0 %v58
  %106 = vmatpush.msra.mxu0 %v57
  %107 = vmatpush.msra.mxu0 %v56
  %108 = vmatpush.msra.mxu0 %v55
  %109 = vmatpush.msra.mxu0 %v54
  %110 = vmatpush.msra.mxu0 %v53
  %111 = vmatpush.msra.mxu0 %v52
  %112 = vmatpush.msra.mxu0 %v51
  %113 = vmatpush.msra.mxu0 %v50
  %114 = vmatmul.f32.gmra.mxu0 %v82
  %v115 = vpop.f32.mrf.mxu0
  %v116 = vadd.f32 0.0, %v115
  %117 = vmatmul.f32.gmra.mxu0 %v83
  %v118 = vpop.f32.mrf.mxu0
  %v119 = vadd.f32 0.0, %v118
  %120 = vmatmul.f32.gmra.mxu0 %v84
  %v121 = vpop.f32.mrf.mxu0
  %v122 = vadd.f32 0.0, %v121
  %123 = vmatmul.f32.gmra.mxu0 %v85
  %v124 = vpop.f32.mrf.mxu0
  %v125 = vadd.f32 0.0, %v124
  %126 = vmatmul.f32.gmra.mxu0 %v86
  %v127 = vpop.f32.mrf.mxu0
  %v128 = vadd.f32 0.0, %v127
  %129 = vmatmul.f32.gmra.mxu0 %v87
  %v130 = vpop.f32.mrf.mxu0
  %v131 = vadd.f32 0.0, %v130
  %132 = vmatmul.f32.gmra.mxu0 %v88
  %v133 = vpop.f32.mrf.mxu0
  %v134 = vadd.f32 0.0, %v133
  %135 = vmatmul.f32.gmra.mxu0 %v89
  %v136 = vpop.f32.mrf.mxu0
  %v137 = vadd.f32 0.0, %v136
  %138 = vmatmul.f32.gmra.mxu0 %v90
  %v139 = vpop.f32.mrf.mxu0
  %v140 = vadd.f32 0.0, %v139
  %141 = vmatmul.f32.gmra.mxu0 %v91
  %v142 = vpop.f32.mrf.mxu0
  %v143 = vadd.f32 0.0, %v142
  %144 = vmatmul.f32.gmra.mxu0 %v92
  %v145 = vpop.f32.mrf.mxu0
  %v146 = vadd.f32 0.0, %v145
  %147 = vmatmul.f32.gmra.mxu0 %v93
  %v148 = vpop.f32.mrf.mxu0
  %v149 = vadd.f32 0.0, %v148
  %150 = vmatmul.f32.gmra.mxu0 %v94
  %v151 = vpop.f32.mrf.mxu0
  %v152 = vadd.f32 0.0, %v151
  %153 = vmatmul.f32.gmra.mxu0 %v95
  %v154 = vpop.f32.mrf.mxu0
  %v155 = vadd.f32 0.0, %v154
  %156 = vmatmul.f32.gmra.mxu0 %v96
  %v157 = vpop.f32.mrf.mxu0
  %v158 = vadd.f32 0.0, %v157
  %159 = vmatmul.f32.gmra.mxu0 %v97
  %v160 = vpop.f32.mrf.mxu0
  %v161 = vadd.f32 0.0, %v160
  %162 = vdwg.mxu0
  %v163 = vld [vmem:[%s7] sm:$0xff]
  %v164 = vld [vmem:[%s7 + $0x8] sm:$0xff]
  %v165 = vld [vmem:[%s7 + $0x10] sm:$0xff]
  %v166 = vld [vmem:[%s7 + $0x18] sm:$0xff]
  %v167 = vld [vmem:[%s7 + $0x20] sm:$0xff]
  %v168 = vld [vmem:[%s7 + $0x28] sm:$0xff]
  %v169 = vld [vmem:[%s7 + $0x30] sm:$0xff]
  %v170 = vld [vmem:[%s7 + $0x38] sm:$0xff]
  %v171 = vld [vmem:[%s7 + $0x40] sm:$0xff]
  %v172 = vld [vmem:[%s7 + $0x48] sm:$0xff]
  %v173 = vld [vmem:[%s7 + $0x50] sm:$0xff]
  %v174 = vld [vmem:[%s7 + $0x58] sm:$0xff]
  %v175 = vld [vmem:[%s7 + $0x60] sm:$0xff]
  %v176 = vld [vmem:[%s7 + $0x68] sm:$0xff]
  %v177 = vld [vmem:[%s7 + $0x70] sm:$0xff]
  %v178 = vld [vmem:[%s7 + $0x78] sm:$0xff]
  %v179 = vld [vmem:[%s8] sm:$0x1]
  %181 = vset.pattern.permute.xlu0 0
  %182 = vperm.xlu0 %181, %v66
  %v183 = vpop.permute.xlu0 %182
  %186 = vset.pattern.permute.xlu0 0
  %187 = vperm.xlu0 %186, %v67
  %v188 = vpop.permute.xlu0 %187
  %191 = vset.pattern.permute.xlu0 0
  %192 = vperm.xlu0 %191, %v68
  %v193 = vpop.permute.xlu0 %192
  %196 = vset.pattern.permute.xlu0 0
  %197 = vperm.xlu0 %196, %v69
  %v198 = vpop.permute.xlu0 %197
  %201 = vset.pattern.permute.xlu0 0
  %202 = vperm.xlu0 %201, %v70
  %v203 = vpop.permute.xlu0 %202
  %206 = vset.pattern.permute.xlu0 0
  %207 = vperm.xlu0 %206, %v71
  %v208 = vpop.permute.xlu0 %207
  %211 = vset.pattern.permute.xlu0 0
  %212 = vperm.xlu0 %211, %v72
  %v213 = vpop.permute.xlu0 %212
  %216 = vset.pattern.permute.xlu0 0
  %217 = vperm.xlu0 %216, %v73
  %v218 = vpop.permute.xlu0 %217
  %221 = vset.pattern.permute.xlu0 0
  %222 = vperm.xlu0 %221, %v74
  %v223 = vpop.permute.xlu0 %222
  %226 = vset.pattern.permute.xlu0 0
  %227 = vperm.xlu0 %226, %v75
  %v228 = vpop.permute.xlu0 %227
  %231 = vset.pattern.permute.xlu0 0
  %232 = vperm.xlu0 %231, %v76
  %v233 = vpop.permute.xlu0 %232
  %236 = vset.pattern.permute.xlu0 0
  %237 = vperm.xlu0 %236, %v77
  %v238 = vpop.permute.xlu0 %237
  %241 = vset.pattern.permute.xlu0 0
  %242 = vperm.xlu0 %241, %v78
  %v243 = vpop.permute.xlu0 %242
  %246 = vset.pattern.permute.xlu0 0
  %247 = vperm.xlu0 %246, %v79
  %v248 = vpop.permute.xlu0 %247
  %251 = vset.pattern.permute.xlu0 0
  %252 = vperm.xlu0 %251, %v80
  %v253 = vpop.permute.xlu0 %252
  %256 = vset.pattern.permute.xlu0 0
  %257 = vperm.xlu0 %256, %v81
  %v258 = vpop.permute.xlu0 %257
  %v260 = vperm.slane %v179, 0
  %v261 = vmul.f32 %v183, %v260
  %v262 = vmul.f32 %v188, %v260
  %v263 = vmul.f32 %v193, %v260
  %v264 = vmul.f32 %v198, %v260
  %v265 = vmul.f32 %v203, %v260
  %v266 = vmul.f32 %v208, %v260
  %v267 = vmul.f32 %v213, %v260
  %v268 = vmul.f32 %v218, %v260
  %v269 = vmul.f32 %v223, %v260
  %v270 = vmul.f32 %v228, %v260
  %v271 = vmul.f32 %v233, %v260
  %v272 = vmul.f32 %v238, %v260
  %v273 = vmul.f32 %v243, %v260
  %v274 = vmul.f32 %v248, %v260
  %v275 = vmul.f32 %v253, %v260
  %v276 = vmul.f32 %v258, %v260
  %277 = vmatpush.msra.mxu0 %v178
  %278 = vmatpush.msra.mxu0 %v177
  %279 = vmatpush.msra.mxu0 %v176
  %280 = vmatpush.msra.mxu0 %v175
  %281 = vmatpush.msra.mxu0 %v174
  %282 = vmatpush.msra.mxu0 %v173
  %283 = vmatpush.msra.mxu0 %v172
  %284 = vmatpush.msra.mxu0 %v171
  %285 = vmatpush.msra.mxu0 %v170
  %286 = vmatpush.msra.mxu0 %v169
  %287 = vmatpush.msra.mxu0 %v168
  %288 = vmatpush.msra.mxu0 %v167
  %289 = vmatpush.msra.mxu0 %v166
  %290 = vmatpush.msra.mxu0 %v165
  %291 = vmatpush.msra.mxu0 %v164
  %292 = vmatpush.msra.mxu0 %v163
  %293 = vmatmul.f32.gmra.mxu0 %v116
  %v294 = vpop.f32.mrf.mxu0
  %v295 = vadd.f32 %v261, %v294
  %296 = vmatmul.f32.gmra.mxu0 %v119
  %v297 = vpop.f32.mrf.mxu0
  %v298 = vadd.f32 %v262, %v297
  %299 = vmatmul.f32.gmra.mxu0 %v122
  %v300 = vpop.f32.mrf.mxu0
  %v301 = vadd.f32 %v263, %v300
  %302 = vmatmul.f32.gmra.mxu0 %v125
  %v303 = vpop.f32.mrf.mxu0
  %v304 = vadd.f32 %v264, %v303
  %305 = vmatmul.f32.gmra.mxu0 %v128
  %v306 = vpop.f32.mrf.mxu0
  %v307 = vadd.f32 %v265, %v306
  %308 = vmatmul.f32.gmra.mxu0 %v131
  %v309 = vpop.f32.mrf.mxu0
  %v310 = vadd.f32 %v266, %v309
  %311 = vmatmul.f32.gmra.mxu0 %v134
  %v312 = vpop.f32.mrf.mxu0
  %v313 = vadd.f32 %v267, %v312
  %314 = vmatmul.f32.gmra.mxu0 %v137
  %v315 = vpop.f32.mrf.mxu0
  %v316 = vadd.f32 %v268, %v315
  %317 = vmatmul.f32.gmra.mxu0 %v140
  %v318 = vpop.f32.mrf.mxu0
  %v319 = vadd.f32 %v269, %v318
  %320 = vmatmul.f32.gmra.mxu0 %v143
  %v321 = vpop.f32.mrf.mxu0
  %v322 = vadd.f32 %v270, %v321
  %323 = vmatmul.f32.gmra.mxu0 %v146
  %v324 = vpop.f32.mrf.mxu0
  %v325 = vadd.f32 %v271, %v324
  %326 = vmatmul.f32.gmra.mxu0 %v149
  %v327 = vpop.f32.mrf.mxu0
  %v328 = vadd.f32 %v272, %v327
  %329 = vmatmul.f32.gmra.mxu0 %v152
  %v330 = vpop.f32.mrf.mxu0
  %v331 = vadd.f32 %v273, %v330
  %332 = vmatmul.f32.gmra.mxu0 %v155
  %v333 = vpop.f32.mrf.mxu0
  %v334 = vadd.f32 %v274, %v333
  %335 = vmatmul.f32.gmra.mxu0 %v158
  %v336 = vpop.f32.mrf.mxu0
  %v337 = vadd.f32 %v275, %v336
  %338 = vmatmul.f32.gmra.mxu0 %v161
  %v339 = vpop.f32.mrf.mxu0
  %v340 = vadd.f32 %v276, %v339
  %341 = vdwg.mxu0
  %v342 = vld [vmem:[%s8 + $0x1] sm:$0x1]
  %343 = vset.pattern.permute.xlu0 1
  %344 = vperm.xlu0 %343, %v66
  %v345 = vpop.permute.xlu0 %344
  %347 = vset.pattern.permute.xlu0 1
  %348 = vperm.xlu0 %347, %v67
  %v349 = vpop.permute.xlu0 %348
  %351 = vset.pattern.permute.xlu0 1
  %352 = vperm.xlu0 %351, %v68
  %v353 = vpop.permute.xlu0 %352
  %355 = vset.pattern.permute.xlu0 1
  %356 = vperm.xlu0 %355, %v69
  %v357 = vpop.permute.xlu0 %356
  %359 = vset.pattern.permute.xlu0 1
  %360 = vperm.xlu0 %359, %v70
  %v361 = vpop.permute.xlu0 %360
  %363 = vset.pattern.permute.xlu0 1
  %364 = vperm.xlu0 %363, %v71
  %v365 = vpop.permute.xlu0 %364
  %367 = vset.pattern.permute.xlu0 1
  %368 = vperm.xlu0 %367, %v72
  %v369 = vpop.permute.xlu0 %368
  %371 = vset.pattern.permute.xlu0 1
  %372 = vperm.xlu0 %371, %v73
  %v373 = vpop.permute.xlu0 %372
  %375 = vset.pattern.permute.xlu0 1
  %376 = vperm.xlu0 %375, %v74
  %v377 = vpop.permute.xlu0 %376
  %379 = vset.pattern.permute.xlu0 1
  %380 = vperm.xlu0 %379, %v75
  %v381 = vpop.permute.xlu0 %380
  %383 = vset.pattern.permute.xlu0 1
  %384 = vperm.xlu0 %383, %v76
  %v385 = vpop.permute.xlu0 %384
  %387 = vset.pattern.permute.xlu0 1
  %388 = vperm.xlu0 %387, %v77
  %v389 = vpop.permute.xlu0 %388
  %391 = vset.pattern.permute.xlu0 1
  %392 = vperm.xlu0 %391, %v78
  %v393 = vpop.permute.xlu0 %392
  %395 = vset.pattern.permute.xlu0 1
  %396 = vperm.xlu0 %395, %v79
  %v397 = vpop.permute.xlu0 %396
  %399 = vset.pattern.permute.xlu0 1
  %400 = vperm.xlu0 %399, %v80
  %v401 = vpop.permute.xlu0 %400
  %403 = vset.pattern.permute.xlu0 1
  %404 = vperm.xlu0 %403, %v81
  %v405 = vpop.permute.xlu0 %404
  %v407 = vperm.slane %v342, 0
  %v408 = vmul.f32 %v345, %v407
  %v409 = vmul.f32 %v349, %v407
  %v410 = vmul.f32 %v353, %v407
  %v411 = vmul.f32 %v357, %v407
  %v412 = vmul.f32 %v361, %v407
  %v413 = vmul.f32 %v365, %v407
  %v414 = vmul.f32 %v369, %v407
  %v415 = vmul.f32 %v373, %v407
  %v416 = vmul.f32 %v377, %v407
  %v417 = vmul.f32 %v381, %v407
  %v418 = vmul.f32 %v385, %v407
  %v419 = vmul.f32 %v389, %v407
  %v420 = vmul.f32 %v393, %v407
  %v421 = vmul.f32 %v397, %v407
  %v422 = vmul.f32 %v401, %v407
  %v423 = vmul.f32 %v405, %v407
  %v424 = vadd.f32 %v295, %v408
  %v425 = vadd.f32 %v298, %v409
  %v426 = vadd.f32 %v301, %v410
  %v427 = vadd.f32 %v304, %v411
  %v428 = vadd.f32 %v307, %v412
  %v429 = vadd.f32 %v310, %v413
  %v430 = vadd.f32 %v313, %v414
  %v431 = vadd.f32 %v316, %v415
  %v432 = vadd.f32 %v319, %v416
  %v433 = vadd.f32 %v322, %v417
  %v434 = vadd.f32 %v325, %v418
  %v435 = vadd.f32 %v328, %v419
  %v436 = vadd.f32 %v331, %v420
  %v437 = vadd.f32 %v334, %v421
  %v438 = vadd.f32 %v337, %v422
  %v439 = vadd.f32 %v340, %v423
  %v440 = vld [vmem:[%s9] sm:$0x1]
  %v442 = vperm.slane %v440, 0
  %v444 = vadd.f32 %v424, %v442
  %v445 = vadd.f32 %v425, %v442
  %v446 = vadd.f32 %v426, %v442
  %v447 = vadd.f32 %v427, %v442
  %v448 = vadd.f32 %v428, %v442
  %v449 = vadd.f32 %v429, %v442
  %v450 = vadd.f32 %v430, %v442
  %v451 = vadd.f32 %v431, %v442
  %v452 = vadd.f32 %v432, %v442
  %v453 = vadd.f32 %v433, %v442
  %v454 = vadd.f32 %v434, %v442
  %v455 = vadd.f32 %v435, %v442
  %v456 = vadd.f32 %v436, %v442
  %v457 = vadd.f32 %v437, %v442
  %v458 = vadd.f32 %v438, %v442
  %v459 = vadd.f32 %v439, %v442
  %v460 = vtanh.pop %v444
  %v461 = vtanh.pop %v445
  %v462 = vtanh.pop %v446
  %v463 = vtanh.pop %v447
  %v464 = vtanh.pop %v448
  %v465 = vtanh.pop %v449
  %v466 = vtanh.pop %v450
  %v467 = vtanh.pop %v451
  %v468 = vtanh.pop %v452
  %v469 = vtanh.pop %v453
  %v470 = vtanh.pop %v454
  %v471 = vtanh.pop %v455
  %v472 = vtanh.pop %v456
  %v473 = vtanh.pop %v457
  %v474 = vtanh.pop %v458
  %v475 = vtanh.pop %v459
  %v476 = vld [vmem:[%s2] sm:$0xff]
  %v477 = vld [vmem:[%s2 + $0x8] sm:$0xff]
  %v478 = vld [vmem:[%s2 + $0x10] sm:$0xff]
  %v479 = vld [vmem:[%s2 + $0x18] sm:$0xff]
  %v480 = vld [vmem:[%s2 + $0x20] sm:$0xff]
  %v481 = vld [vmem:[%s2 + $0x28] sm:$0xff]
  %v482 = vld [vmem:[%s2 + $0x30] sm:$0xff]
  %v483 = vld [vmem:[%s2 + $0x38] sm:$0xff]
  %v484 = vld [vmem:[%s2 + $0x40] sm:$0xff]
  %v485 = vld [vmem:[%s2 + $0x48] sm:$0xff]
  %v486 = vld [vmem:[%s2 + $0x50] sm:$0xff]
  %v487 = vld [vmem:[%s2 + $0x58] sm:$0xff]
  %v488 = vld [vmem:[%s2 + $0x60] sm:$0xff]
  %v489 = vld [vmem:[%s2 + $0x68] sm:$0xff]
  %v490 = vld [vmem:[%s2 + $0x70] sm:$0xff]
  %v491 = vld [vmem:[%s2 + $0x78] sm:$0xff]
  %v492 = vld [vmem:[%s10] sm:$0x1]
  %v494 = vperm.slane %v492, 0
  %496 = vmatpush.msra.mxu0 %v475
  %497 = vmatpush.msra.mxu0 %v474
  %498 = vmatpush.msra.mxu0 %v473
  %499 = vmatpush.msra.mxu0 %v472
  %500 = vmatpush.msra.mxu0 %v471
  %501 = vmatpush.msra.mxu0 %v470
  %502 = vmatpush.msra.mxu0 %v469
  %503 = vmatpush.msra.mxu0 %v468
  %504 = vmatpush.msra.mxu0 %v467
  %505 = vmatpush.msra.mxu0 %v466
  %506 = vmatpush.msra.mxu0 %v465
  %507 = vmatpush.msra.mxu0 %v464
  %508 = vmatpush.msra.mxu0 %v463
  %509 = vmatpush.msra.mxu0 %v462
  %510 = vmatpush.msra.mxu0 %v461
  %511 = vmatpush.msra.mxu0 %v460
  %512 = vmatmul.f32.gmra.mxu0 %v476
  %v513 = vpop.f32.mrf.mxu0
  %v514 = vadd.f32 %v494, %v513
  %515 = vmatmul.f32.gmra.mxu0 %v477
  %v516 = vpop.f32.mrf.mxu0
  %v517 = vadd.f32 %v494, %v516
  %518 = vmatmul.f32.gmra.mxu0 %v478
  %v519 = vpop.f32.mrf.mxu0
  %v520 = vadd.f32 %v494, %v519
  %521 = vmatmul.f32.gmra.mxu0 %v479
  %v522 = vpop.f32.mrf.mxu0
  %v523 = vadd.f32 %v494, %v522
  %524 = vmatmul.f32.gmra.mxu0 %v480
  %v525 = vpop.f32.mrf.mxu0
  %v526 = vadd.f32 %v494, %v525
  %527 = vmatmul.f32.gmra.mxu0 %v481
  %v528 = vpop.f32.mrf.mxu0
  %v529 = vadd.f32 %v494, %v528
  %530 = vmatmul.f32.gmra.mxu0 %v482
  %v531 = vpop.f32.mrf.mxu0
  %v532 = vadd.f32 %v494, %v531
  %533 = vmatmul.f32.gmra.mxu0 %v483
  %v534 = vpop.f32.mrf.mxu0
  %v535 = vadd.f32 %v494, %v534
  %536 = vmatmul.f32.gmra.mxu0 %v484
  %v537 = vpop.f32.mrf.mxu0
  %v538 = vadd.f32 %v494, %v537
  %539 = vmatmul.f32.gmra.mxu0 %v485
  %v540 = vpop.f32.mrf.mxu0
  %v541 = vadd.f32 %v494, %v540
  %542 = vmatmul.f32.gmra.mxu0 %v486
  %v543 = vpop.f32.mrf.mxu0
  %v544 = vadd.f32 %v494, %v543
  %545 = vmatmul.f32.gmra.mxu0 %v487
  %v546 = vpop.f32.mrf.mxu0
  %v547 = vadd.f32 %v494, %v546
  %548 = vmatmul.f32.gmra.mxu0 %v488
  %v549 = vpop.f32.mrf.mxu0
  %v550 = vadd.f32 %v494, %v549
  %551 = vmatmul.f32.gmra.mxu0 %v489
  %v552 = vpop.f32.mrf.mxu0
  %v553 = vadd.f32 %v494, %v552
  %554 = vmatmul.f32.gmra.mxu0 %v490
  %v555 = vpop.f32.mrf.mxu0
  %v556 = vadd.f32 %v494, %v555
  %557 = vmatmul.f32.gmra.mxu0 %v491
  %v558 = vpop.f32.mrf.mxu0
  %v559 = vadd.f32 %v494, %v558
  %560 = vdwg.mxu0
  %v561 = vmax.f32 %v514, 0.0
  %v562 = vmax.f32 %v517, 0.0
  %v563 = vmax.f32 %v520, 0.0
  %v564 = vmax.f32 %v523, 0.0
  %v565 = vmax.f32 %v526, 0.0
  %v566 = vmax.f32 %v529, 0.0
  %v567 = vmax.f32 %v532, 0.0
  %v568 = vmax.f32 %v535, 0.0
  %v569 = vmax.f32 %v538, 0.0
  %v570 = vmax.f32 %v541, 0.0
  %v571 = vmax.f32 %v544, 0.0
  %v572 = vmax.f32 %v547, 0.0
  %v573 = vmax.f32 %v550, 0.0
  %v574 = vmax.f32 %v553, 0.0
  %v575 = vmax.f32 %v556, 0.0
  %v576 = vmax.f32 %v559, 0.0
  %v577 = vld [vmem:[%s11] sm:$0xff]
  %v578 = vld [vmem:[%s11 + $0x8] sm:$0xff]
  %v579 = vld [vmem:[%s11 + $0x10] sm:$0xff]
  %v580 = vld [vmem:[%s11 + $0x18] sm:$0xff]
  %v581 = vld [vmem:[%s11 + $0x20] sm:$0xff]
  %v582 = vld [vmem:[%s11 + $0x28] sm:$0xff]
  %v583 = vld [vmem:[%s11 + $0x30] sm:$0xff]
  %v584 = vld [vmem:[%s11 + $0x38] sm:$0xff]
  %v585 = vld [vmem:[%s11 + $0x40] sm:$0xff]
  %v586 = vld [vmem:[%s11 + $0x48] sm:$0xff]
  %v587 = vld [vmem:[%s11 + $0x50] sm:$0xff]
  %v588 = vld [vmem:[%s11 + $0x58] sm:$0xff]
  %v589 = vld [vmem:[%s11 + $0x60] sm:$0xff]
  %v590 = vld [vmem:[%s11 + $0x68] sm:$0xff]
  %v591 = vld [vmem:[%s11 + $0x70] sm:$0xff]
  %v592 = vld [vmem:[%s11 + $0x78] sm:$0xff]
  %593 = vmatpush.msra.mxu0 %v592
  %594 = vmatpush.msra.mxu0 %v591
  %595 = vmatpush.msra.mxu0 %v590
  %596 = vmatpush.msra.mxu0 %v589
  %597 = vmatpush.msra.mxu0 %v588
  %598 = vmatpush.msra.mxu0 %v587
  %599 = vmatpush.msra.mxu0 %v586
  %600 = vmatpush.msra.mxu0 %v585
  %601 = vmatpush.msra.mxu0 %v584
  %602 = vmatpush.msra.mxu0 %v583
  %603 = vmatpush.msra.mxu0 %v582
  %604 = vmatpush.msra.mxu0 %v581
  %605 = vmatpush.msra.mxu0 %v580
  %606 = vmatpush.msra.mxu0 %v579
  %607 = vmatpush.msra.mxu0 %v578
  %608 = vmatpush.msra.mxu0 %v577
  %609 = vmatmul.f32.gmra.mxu0 %v561
  %v610 = vpop.f32.mrf.mxu0
  %v611 = vadd.f32 0.0, %v610
  %612 = vmatmul.f32.gmra.mxu0 %v562
  %v613 = vpop.f32.mrf.mxu0
  %v614 = vadd.f32 0.0, %v613
  %615 = vmatmul.f32.gmra.mxu0 %v563
  %v616 = vpop.f32.mrf.mxu0
  %v617 = vadd.f32 0.0, %v616
  %618 = vmatmul.f32.gmra.mxu0 %v564
  %v619 = vpop.f32.mrf.mxu0
  %v620 = vadd.f32 0.0, %v619
  %621 = vmatmul.f32.gmra.mxu0 %v565
  %v622 = vpop.f32.mrf.mxu0
  %v623 = vadd.f32 0.0, %v622
  %624 = vmatmul.f32.gmra.mxu0 %v566
  %v625 = vpop.f32.mrf.mxu0
  %v626 = vadd.f32 0.0, %v625
  %627 = vmatmul.f32.gmra.mxu0 %v567
  %v628 = vpop.f32.mrf.mxu0
  %v629 = vadd.f32 0.0, %v628
  %630 = vmatmul.f32.gmra.mxu0 %v568
  %v631 = vpop.f32.mrf.mxu0
  %v632 = vadd.f32 0.0, %v631
  %633 = vmatmul.f32.gmra.mxu0 %v569
  %v634 = vpop.f32.mrf.mxu0
  %v635 = vadd.f32 0.0, %v634
  %636 = vmatmul.f32.gmra.mxu0 %v570
  %v637 = vpop.f32.mrf.mxu0
  %v638 = vadd.f32 0.0, %v637
  %639 = vmatmul.f32.gmra.mxu0 %v571
  %v640 = vpop.f32.mrf.mxu0
  %v641 = vadd.f32 0.0, %v640
  %642 = vmatmul.f32.gmra.mxu0 %v572
  %v643 = vpop.f32.mrf.mxu0
  %v644 = vadd.f32 0.0, %v643
  %645 = vmatmul.f32.gmra.mxu0 %v573
  %v646 = vpop.f32.mrf.mxu0
  %v647 = vadd.f32 0.0, %v646
  %648 = vmatmul.f32.gmra.mxu0 %v574
  %v649 = vpop.f32.mrf.mxu0
  %v650 = vadd.f32 0.0, %v649
  %651 = vmatmul.f32.gmra.mxu0 %v575
  %v652 = vpop.f32.mrf.mxu0
  %v653 = vadd.f32 0.0, %v652
  %654 = vmatmul.f32.gmra.mxu0 %v576
  %v655 = vpop.f32.mrf.mxu0
  %v656 = vadd.f32 0.0, %v655
  %657 = vdwg.mxu0
  %v658 = vld [vmem:[%s4] sm:$0xff]
  %v659 = vld [vmem:[%s4 + $0x8] sm:$0xff]
  %v660 = vld [vmem:[%s4 + $0x10] sm:$0xff]
  %v661 = vld [vmem:[%s4 + $0x18] sm:$0xff]
  %v662 = vld [vmem:[%s4 + $0x20] sm:$0xff]
  %v663 = vld [vmem:[%s4 + $0x28] sm:$0xff]
  %v664 = vld [vmem:[%s4 + $0x30] sm:$0xff]
  %v665 = vld [vmem:[%s4 + $0x38] sm:$0xff]
  %v666 = vld [vmem:[%s4 + $0x40] sm:$0xff]
  %v667 = vld [vmem:[%s4 + $0x48] sm:$0xff]
  %v668 = vld [vmem:[%s4 + $0x50] sm:$0xff]
  %v669 = vld [vmem:[%s4 + $0x58] sm:$0xff]
  %v670 = vld [vmem:[%s4 + $0x60] sm:$0xff]
  %v671 = vld [vmem:[%s4 + $0x68] sm:$0xff]
  %v672 = vld [vmem:[%s4 + $0x70] sm:$0xff]
  %v673 = vld [vmem:[%s4 + $0x78] sm:$0xff]
  %v674 = vld [vmem:[%s5] sm:$0xff]
  %v675 = vld [vmem:[%s5 + $0x8] sm:$0xff]
  %v676 = vld [vmem:[%s5 + $0x10] sm:$0xff]
  %v677 = vld [vmem:[%s5 + $0x18] sm:$0xff]
  %v678 = vld [vmem:[%s5 + $0x20] sm:$0xff]
  %v679 = vld [vmem:[%s5 + $0x28] sm:$0xff]
  %v680 = vld [vmem:[%s5 + $0x30] sm:$0xff]
  %v681 = vld [vmem:[%s5 + $0x38] sm:$0xff]
  %v682 = vld [vmem:[%s5 + $0x40] sm:$0xff]
  %v683 = vld [vmem:[%s5 + $0x48] sm:$0xff]
  %v684 = vld [vmem:[%s5 + $0x50] sm:$0xff]
  %v685 = vld [vmem:[%s5 + $0x58] sm:$0xff]
  %v686 = vld [vmem:[%s5 + $0x60] sm:$0xff]
  %v687 = vld [vmem:[%s5 + $0x68] sm:$0xff]
  %v688 = vld [vmem:[%s5 + $0x70] sm:$0xff]
  %v689 = vld [vmem:[%s5 + $0x78] sm:$0xff]
  %v690 = vld [vmem:[%s12] sm:$0x1]
  %692 = vset.pattern.permute.xlu0 0
  %693 = vperm.xlu0 %692, %v674
  %v694 = vpop.permute.xlu0 %693
  %697 = vset.pattern.permute.xlu0 0
  %698 = vperm.xlu0 %697, %v675
  %v699 = vpop.permute.xlu0 %698
  %702 = vset.pattern.permute.xlu0 0
  %703 = vperm.xlu0 %702, %v676
  %v704 = vpop.permute.xlu0 %703
  %707 = vset.pattern.permute.xlu0 0
  %708 = vperm.xlu0 %707, %v677
  %v709 = vpop.permute.xlu0 %708
  %712 = vset.pattern.permute.xlu0 0
  %713 = vperm.xlu0 %712, %v678
  %v714 = vpop.permute.xlu0 %713
  %717 = vset.pattern.permute.xlu0 0
  %718 = vperm.xlu0 %717, %v679
  %v719 = vpop.permute.xlu0 %718
  %722 = vset.pattern.permute.xlu0 0
  %723 = vperm.xlu0 %722, %v680
  %v724 = vpop.permute.xlu0 %723
  %727 = vset.pattern.permute.xlu0 0
  %728 = vperm.xlu0 %727, %v681
  %v729 = vpop.permute.xlu0 %728
  %732 = vset.pattern.permute.xlu0 0
  %733 = vperm.xlu0 %732, %v682
  %v734 = vpop.permute.xlu0 %733
  %737 = vset.pattern.permute.xlu0 0
  %738 = vperm.xlu0 %737, %v683
  %v739 = vpop.permute.xlu0 %738
  %742 = vset.pattern.permute.xlu0 0
  %743 = vperm.xlu0 %742, %v684
  %v744 = vpop.permute.xlu0 %743
  %747 = vset.pattern.permute.xlu0 0
  %748 = vperm.xlu0 %747, %v685
  %v749 = vpop.permute.xlu0 %748
  %752 = vset.pattern.permute.xlu0 0
  %753 = vperm.xlu0 %752, %v686
  %v754 = vpop.permute.xlu0 %753
  %757 = vset.pattern.permute.xlu0 0
  %758 = vperm.xlu0 %757, %v687
  %v759 = vpop.permute.xlu0 %758
  %762 = vset.pattern.permute.xlu0 0
  %763 = vperm.xlu0 %762, %v688
  %v764 = vpop.permute.xlu0 %763
  %767 = vset.pattern.permute.xlu0 0
  %768 = vperm.xlu0 %767, %v689
  %v769 = vpop.permute.xlu0 %768
  %v771 = vperm.slane %v690, 0
  %v772 = vmul.f32 %v694, %v771
  %v773 = vmul.f32 %v699, %v771
  %v774 = vmul.f32 %v704, %v771
  %v775 = vmul.f32 %v709, %v771
  %v776 = vmul.f32 %v714, %v771
  %v777 = vmul.f32 %v719, %v771
  %v778 = vmul.f32 %v724, %v771
  %v779 = vmul.f32 %v729, %v771
  %v780 = vmul.f32 %v734, %v771
  %v781 = vmul.f32 %v739, %v771
  %v782 = vmul.f32 %v744, %v771
  %v783 = vmul.f32 %v749, %v771
  %v784 = vmul.f32 %v754, %v771
  %v785 = vmul.f32 %v759, %v771
  %v786 = vmul.f32 %v764, %v771
  %v787 = vmul.f32 %v769, %v771
  %788 = vmatpush.msra.mxu0 %v656
  %789 = vmatpush.msra.mxu0 %v653
  %790 = vmatpush.msra.mxu0 %v650
  %791 = vmatpush.msra.mxu0 %v647
  %792 = vmatpush.msra.mxu0 %v644
  %793 = vmatpush.msra.mxu0 %v641
  %794 = vmatpush.msra.mxu0 %v638
  %795 = vmatpush.msra.mxu0 %v635
  %796 = vmatpush.msra.mxu0 %v632
  %797 = vmatpush.msra.mxu0 %v629
  %798 = vmatpush.msra.mxu0 %v626
  %799 = vmatpush.msra.mxu0 %v623
  %800 = vmatpush.msra.mxu0 %v620
  %801 = vmatpush.msra.mxu0 %v617
  %802 = vmatpush.msra.mxu0 %v614
  %803 = vmatpush.msra.mxu0 %v611
  %804 = vmatmul.f32.gmra.mxu0 %v658
  %v805 = vpop.f32.mrf.mxu0
  %v806 = vadd.f32 %v772, %v805
  %807 = vmatmul.f32.gmra.mxu0 %v659
  %v808 = vpop.f32.mrf.mxu0
  %v809 = vadd.f32 %v773, %v808
  %810 = vmatmul.f32.gmra.mxu0 %v660
  %v811 = vpop.f32.mrf.mxu0
  %v812 = vadd.f32 %v774, %v811
  %813 = vmatmul.f32.gmra.mxu0 %v661
  %v814 = vpop.f32.mrf.mxu0
  %v815 = vadd.f32 %v775, %v814
  %816 = vmatmul.f32.gmra.mxu0 %v662
  %v817 = vpop.f32.mrf.mxu0
  %v818 = vadd.f32 %v776, %v817
  %819 = vmatmul.f32.gmra.mxu0 %v663
  %v820 = vpop.f32.mrf.mxu0
  %v821 = vadd.f32 %v777, %v820
  %822 = vmatmul.f32.gmra.mxu0 %v664
  %v823 = vpop.f32.mrf.mxu0
  %v824 = vadd.f32 %v778, %v823
  %825 = vmatmul.f32.gmra.mxu0 %v665
  %v826 = vpop.f32.mrf.mxu0
  %v827 = vadd.f32 %v779, %v826
  %828 = vmatmul.f32.gmra.mxu0 %v666
  %v829 = vpop.f32.mrf.mxu0
  %v830 = vadd.f32 %v780, %v829
  %831 = vmatmul.f32.gmra.mxu0 %v667
  %v832 = vpop.f32.mrf.mxu0
  %v833 = vadd.f32 %v781, %v832
  %834 = vmatmul.f32.gmra.mxu0 %v668
  %v835 = vpop.f32.mrf.mxu0
  %v836 = vadd.f32 %v782, %v835
  %837 = vmatmul.f32.gmra.mxu0 %v669
  %v838 = vpop.f32.mrf.mxu0
  %v839 = vadd.f32 %v783, %v838
  %840 = vmatmul.f32.gmra.mxu0 %v670
  %v841 = vpop.f32.mrf.mxu0
  %v842 = vadd.f32 %v784, %v841
  %843 = vmatmul.f32.gmra.mxu0 %v671
  %v844 = vpop.f32.mrf.mxu0
  %v845 = vadd.f32 %v785, %v844
  %846 = vmatmul.f32.gmra.mxu0 %v672
  %v847 = vpop.f32.mrf.mxu0
  %v848 = vadd.f32 %v786, %v847
  %849 = vmatmul.f32.gmra.mxu0 %v673
  %v850 = vpop.f32.mrf.mxu0
  %v851 = vadd.f32 %v787, %v850
  %852 = vdwg.mxu0
  %v853 = vld [vmem:[%s12 + $0x1] sm:$0x1]
  %854 = vset.pattern.permute.xlu0 1
  %855 = vperm.xlu0 %854, %v674
  %v856 = vpop.permute.xlu0 %855
  %858 = vset.pattern.permute.xlu0 1
  %859 = vperm.xlu0 %858, %v675
  %v860 = vpop.permute.xlu0 %859
  %862 = vset.pattern.permute.xlu0 1
  %863 = vperm.xlu0 %862, %v676
  %v864 = vpop.permute.xlu0 %863
  %866 = vset.pattern.permute.xlu0 1
  %867 = vperm.xlu0 %866, %v677
  %v868 = vpop.permute.xlu0 %867
  %870 = vset.pattern.permute.xlu0 1
  %871 = vperm.xlu0 %870, %v678
  %v872 = vpop.permute.xlu0 %871
  %874 = vset.pattern.permute.xlu0 1
  %875 = vperm.xlu0 %874, %v679
  %v876 = vpop.permute.xlu0 %875
  %878 = vset.pattern.permute.xlu0 1
  %879 = vperm.xlu0 %878, %v680
  %v880 = vpop.permute.xlu0 %879
  %882 = vset.pattern.permute.xlu0 1
  %883 = vperm.xlu0 %882, %v681
  %v884 = vpop.permute.xlu0 %883
  %886 = vset.pattern.permute.xlu0 1
  %887 = vperm.xlu0 %886, %v682
  %v888 = vpop.permute.xlu0 %887
  %890 = vset.pattern.permute.xlu0 1
  %891 = vperm.xlu0 %890, %v683
  %v892 = vpop.permute.xlu0 %891
  %894 = vset.pattern.permute.xlu0 1
  %895 = vperm.xlu0 %894, %v684
  %v896 = vpop.permute.xlu0 %895
  %898 = vset.pattern.permute.xlu0 1
  %899 = vperm.xlu0 %898, %v685
  %v900 = vpop.permute.xlu0 %899
  %902 = vset.pattern.permute.xlu0 1
  %903 = vperm.xlu0 %902, %v686
  %v904 = vpop.permute.xlu0 %903
  %906 = vset.pattern.permute.xlu0 1
  %907 = vperm.xlu0 %906, %v687
  %v908 = vpop.permute.xlu0 %907
  %910 = vset.pattern.permute.xlu0 1
  %911 = vperm.xlu0 %910, %v688
  %v912 = vpop.permute.xlu0 %911
  %914 = vset.pattern.permute.xlu0 1
  %915 = vperm.xlu0 %914, %v689
  %v916 = vpop.permute.xlu0 %915
  %v918 = vperm.slane %v853, 0
  %v919 = vmul.f32 %v856, %v918
  %v920 = vmul.f32 %v860, %v918
  %v921 = vmul.f32 %v864, %v918
  %v922 = vmul.f32 %v868, %v918
  %v923 = vmul.f32 %v872, %v918
  %v924 = vmul.f32 %v876, %v918
  %v925 = vmul.f32 %v880, %v918
  %v926 = vmul.f32 %v884, %v918
  %v927 = vmul.f32 %v888, %v918
  %v928 = vmul.f32 %v892, %v918
  %v929 = vmul.f32 %v896, %v918
  %v930 = vmul.f32 %v900, %v918
  %v931 = vmul.f32 %v904, %v918
  %v932 = vmul.f32 %v908, %v918
  %v933 = vmul.f32 %v912, %v918
  %v934 = vmul.f32 %v916, %v918
  %v935 = vadd.f32 %v806, %v919
  %v936 = vadd.f32 %v809, %v920
  %v937 = vadd.f32 %v812, %v921
  %v938 = vadd.f32 %v815, %v922
  %v939 = vadd.f32 %v818, %v923
  %v940 = vadd.f32 %v821, %v924
  %v941 = vadd.f32 %v824, %v925
  %v942 = vadd.f32 %v827, %v926
  %v943 = vadd.f32 %v830, %v927
  %v944 = vadd.f32 %v833, %v928
  %v945 = vadd.f32 %v836, %v929
  %v946 = vadd.f32 %v839, %v930
  %v947 = vadd.f32 %v842, %v931
  %v948 = vadd.f32 %v845, %v932
  %v949 = vadd.f32 %v848, %v933
  %v950 = vadd.f32 %v851, %v934
  %v951 = vld [vmem:[%s6] sm:$0xff]
  %v952 = vld [vmem:[%s6 + $0x8] sm:$0xff]
  %v953 = vld [vmem:[%s6 + $0x10] sm:$0xff]
  %v954 = vld [vmem:[%s6 + $0x18] sm:$0xff]
  %v955 = vld [vmem:[%s6 + $0x20] sm:$0xff]
  %v956 = vld [vmem:[%s6 + $0x28] sm:$0xff]
  %v957 = vld [vmem:[%s6 + $0x30] sm:$0xff]
  %v958 = vld [vmem:[%s6 + $0x38] sm:$0xff]
  %v959 = vld [vmem:[%s6 + $0x40] sm:$0xff]
  %v960 = vld [vmem:[%s6 + $0x48] sm:$0xff]
  %v961 = vld [vmem:[%s6 + $0x50] sm:$0xff]
  %v962 = vld [vmem:[%s6 + $0x58] sm:$0xff]
  %v963 = vld [vmem:[%s6 + $0x60] sm:$0xff]
  %v964 = vld [vmem:[%s6 + $0x68] sm:$0xff]
  %v965 = vld [vmem:[%s6 + $0x70] sm:$0xff]
  %v966 = vld [vmem:[%s6 + $0x78] sm:$0xff]
  %v967 = vld [vmem:[%s13] sm:$0x1]
  %969 = vset.pattern.permute.xlu0 0
  %970 = vperm.xlu0 %969, %v951
  %v971 = vpop.permute.xlu0 %970
  %974 = vset.pattern.permute.xlu0 0
  %975 = vperm.xlu0 %974, %v952
  %v976 = vpop.permute.xlu0 %975
  %979 = vset.pattern.permute.xlu0 0
  %980 = vperm.xlu0 %979, %v953
  %v981 = vpop.permute.xlu0 %980
  %984 = vset.pattern.permute.xlu0 0
  %985 = vperm.xlu0 %984, %v954
  %v986 = vpop.permute.xlu0 %985
  %989 = vset.pattern.permute.xlu0 0
  %990 = vperm.xlu0 %989, %v955
  %v991 = vpop.permute.xlu0 %990
  %994 = vset.pattern.permute.xlu0 0
  %995 = vperm.xlu0 %994, %v956
  %v996 = vpop.permute.xlu0 %995
  %999 = vset.pattern.permute.xlu0 0
  %1000 = vperm.xlu0 %999, %v957
  %v1001 = vpop.permute.xlu0 %1000
  %1004 = vset.pattern.permute.xlu0 0
  %1005 = vperm.xlu0 %1004, %v958
  %v1006 = vpop.permute.xlu0 %1005
  %1009 = vset.pattern.permute.xlu0 0
  %1010 = vperm.xlu0 %1009, %v959
  %v1011 = vpop.permute.xlu0 %1010
  %1014 = vset.pattern.permute.xlu0 0
  %1015 = vperm.xlu0 %1014, %v960
  %v1016 = vpop.permute.xlu0 %1015
  %1019 = vset.pattern.permute.xlu0 0
  %1020 = vperm.xlu0 %1019, %v961
  %v1021 = vpop.permute.xlu0 %1020
  %1024 = vset.pattern.permute.xlu0 0
  %1025 = vperm.xlu0 %1024, %v962
  %v1026 = vpop.permute.xlu0 %1025
  %1029 = vset.pattern.permute.xlu0 0
  %1030 = vperm.xlu0 %1029, %v963
  %v1031 = vpop.permute.xlu0 %1030
  %1034 = vset.pattern.permute.xlu0 0
  %1035 = vperm.xlu0 %1034, %v964
  %v1036 = vpop.permute.xlu0 %1035
  %1039 = vset.pattern.permute.xlu0 0
  %1040 = vperm.xlu0 %1039, %v965
  %v1041 = vpop.permute.xlu0 %1040
  %1044 = vset.pattern.permute.xlu0 0
  %1045 = vperm.xlu0 %1044, %v966
  %v1046 = vpop.permute.xlu0 %1045
  %v1049 = vperm.slane %v967, 0
  %v1051 = vmul.f32 %v971, %v1049
  %v1052 = vmul.f32 %v976, %v1049
  %v1053 = vmul.f32 %v981, %v1049
  %v1054 = vmul.f32 %v986, %v1049
  %v1055 = vmul.f32 %v991, %v1049
  %v1056 = vmul.f32 %v996, %v1049
  %v1057 = vmul.f32 %v1001, %v1049
  %v1058 = vmul.f32 %v1006, %v1049
  %v1059 = vmul.f32 %v1011, %v1049
  %v1060 = vmul.f32 %v1016, %v1049
  %v1061 = vmul.f32 %v1021, %v1049
  %v1062 = vmul.f32 %v1026, %v1049
  %v1063 = vmul.f32 %v1031, %v1049
  %v1064 = vmul.f32 %v1036, %v1049
  %v1065 = vmul.f32 %v1041, %v1049
  %v1066 = vmul.f32 %v1046, %v1049
  %v1067 = vadd.f32 %v935, %v1051
  %v1068 = vadd.f32 %v936, %v1052
  %v1069 = vadd.f32 %v937, %v1053
  %v1070 = vadd.f32 %v938, %v1054
  %v1071 = vadd.f32 %v939, %v1055
  %v1072 = vadd.f32 %v940, %v1056
  %v1073 = vadd.f32 %v941, %v1057
  %v1074 = vadd.f32 %v942, %v1058
  %v1075 = vadd.f32 %v943, %v1059
  %v1076 = vadd.f32 %v944, %v1060
  %v1077 = vadd.f32 %v945, %v1061
  %v1078 = vadd.f32 %v946, %v1062
  %v1079 = vadd.f32 %v947, %v1063
  %v1080 = vadd.f32 %v948, %v1064
  %v1081 = vadd.f32 %v949, %v1065
  %v1082 = vadd.f32 %v950, %v1066
  %v1083 = vld [vmem:[%s14] sm:$0x1]
  %v1085 = vperm.slane %v1083, 0
  %v1087 = vadd.f32 %v1067, %v1085
  %v1088 = vadd.f32 %v1068, %v1085
  %v1089 = vadd.f32 %v1069, %v1085
  %v1090 = vadd.f32 %v1070, %v1085
  %v1091 = vadd.f32 %v1071, %v1085
  %v1092 = vadd.f32 %v1072, %v1085
  %v1093 = vadd.f32 %v1073, %v1085
  %v1094 = vadd.f32 %v1074, %v1085
  %v1095 = vadd.f32 %v1075, %v1085
  %v1096 = vadd.f32 %v1076, %v1085
  %v1097 = vadd.f32 %v1077, %v1085
  %v1098 = vadd.f32 %v1078, %v1085
  %v1099 = vadd.f32 %v1079, %v1085
  %v1100 = vadd.f32 %v1080, %v1085
  %v1101 = vadd.f32 %v1081, %v1085
  %v1102 = vadd.f32 %v1082, %v1085
  %1103 = vst [vmem:[%s15] sm:$0xff] %v1087
  %1104 = vst [vmem:[%s15 + $0x8] sm:$0xff] %v1088
  %1105 = vst [vmem:[%s15 + $0x10] sm:$0xff] %v1089
  %1106 = vst [vmem:[%s15 + $0x18] sm:$0xff] %v1090
  %1107 = vst [vmem:[%s15 + $0x20] sm:$0xff] %v1091
  %1108 = vst [vmem:[%s15 + $0x28] sm:$0xff] %v1092
  %1109 = vst [vmem:[%s15 + $0x30] sm:$0xff] %v1093
  %1110 = vst [vmem:[%s15 + $0x38] sm:$0xff] %v1094
  %1111 = vst [vmem:[%s15 + $0x40] sm:$0xff] %v1095
  %1112 = vst [vmem:[%s15 + $0x48] sm:$0xff] %v1096
  %1113 = vst [vmem:[%s15 + $0x50] sm:$0xff] %v1097
  %1114 = vst [vmem:[%s15 + $0x58] sm:$0xff] %v1098
  %1115 = vst [vmem:[%s15 + $0x60] sm:$0xff] %v1099
  %1116 = vst [vmem:[%s15 + $0x68] sm:$0xff] %v1100
  %1117 = vst [vmem:[%s15 + $0x70] sm:$0xff] %v1101
  %1118 = vst [vmem:[%s15 + $0x78] sm:$0xff] %v1102
  // Predicated region
  $region62: #{grid_gnn_forward.1} parent=0 // pred_check
    _
  $region63: #{grid_gnn_forward.1} parent=0 // pred_check_branch
    %1120 = sbr.rel (0) target = $region65
  $region64: #{grid_gnn_forward.1} parent=0 // pred_region
    _
  $region65: #{grid_gnn_forward.1} parent=0 // pred_fallthru
    _
  // Predicated region
  $region66: #{grid_gnn_forward.1} parent=0 // pred_check
    _
  $region67: #{grid_gnn_forward.1} parent=0 // pred_check_branch
    %1122 = sbr.rel (0) target = $region69
  $region68: #{grid_gnn_forward.1} parent=0 // pred_region
    _
  $region69: #{grid_gnn_forward.1} parent=0 // pred_fallthru
    _

</llo_original>
